<compile_context>
chip_gen: v5e
topology: v5e:2x2
jax: 0.10.0
libtpu: 0.0.40
codegen_flags: <defaults>
</compile_context>

<pallas_src>
import jax
import jax.numpy as jnp
from jax.experimental import pallas as pl
from jax.experimental.pallas import tpu as pltpu

IN_FEATURES = 784
OUT_CLASSES = 10
OUT_PAD = 128            # lane-dense output; wrapper slices [:, :10]
HID1, HID2, HID3 = 256, 128, 64
HID3_PAD = 128           # full MXU tile for layer-3 N / layer-4 K


def _round_up(n, m):
    return (n + m - 1) // m * m


def mlp_kernel(x_ref,
               w1_ref, b1_ref,
               w2_ref, b2_ref,
               w3_ref, b3_ref,
               w4_ref, b4_ref,
               o_ref):
    """One batch tile: 4 MXU matmuls (bf16 in, f32 acc) + f32 relu + softmax."""
    # f32 -> bf16 cast in-kernel: avoids a wrapper-side padded bf16 HBM copy.
    x = x_ref[...].astype(jnp.bfloat16)                               # (TB, 784)

    h1 = jnp.dot(x, w1_ref[...], preferred_element_type=jnp.float32) + b1_ref[...]
    h1 = jnp.maximum(h1, 0.0)                                         # relu (dropout = identity)

    h2 = jnp.dot(h1.astype(jnp.bfloat16), w2_ref[...],
                 preferred_element_type=jnp.float32) + b2_ref[...]
    h2 = jnp.maximum(h2, 0.0)

    h3 = jnp.dot(h2.astype(jnp.bfloat16), w3_ref[...],
                 preferred_element_type=jnp.float32) + b3_ref[...]    # (TB, 128) padded
    h3 = jnp.maximum(h3, 0.0)                                         # padded lanes stay 0

    logits = jnp.dot(h3.astype(jnp.bfloat16), w4_ref[...],
                     preferred_element_type=jnp.float32) + b4_ref[...]  # (TB, 128)
    # padded class lanes already hold -1e30 (pre-poisoned bias + zero w4 cols)

    # numerically-stable softmax over dim=1 (exact divide)
    m = jnp.max(logits, axis=-1, keepdims=True)
    e = jnp.exp(logits - m)
    denom = jnp.sum(e, axis=-1, keepdims=True)
    o_ref[...] = (e / denom).astype(o_ref.dtype)


def network_forward(x_nchw, params):
    """x_nchw: (B, 1, 28, 28) float32 -> (B, 10) softmax probabilities."""
    B = x_nchw.shape[0]
    (w1, b1), (w2, b2), (w3, b3), (w4, b4) = params

    # Batch tile selection:
    #  - tiny batches: one tile (sublane-aligned)
    #  - larger batches: cap at 1024 but keep >= 2 grid steps so v7x megacore
    #    ("parallel" batch axis) can use both TensorCores
    B8 = _round_up(max(B, 8), 8)
    if B8 <= 256:
        TB = B8
    else:
        TB = min(1024, max(256, _round_up(-(-B8 // 2), 256)))
    B_pad = _round_up(B8, TB)

    # x.view(B, -1) -> (B, 784) f32; only the batch dim is (possibly) padded.
    x = x_nchw.reshape(B, -1)
    if B_pad != B:
        x = jnp.pad(x, ((0, B_pad - B), (0, 0)))

    # weights shipped as bf16 (resident in VMEM across grid steps); biases f32
    w1p = w1.astype(jnp.bfloat16)                                          # (784, 256)
    w2p = w2.astype(jnp.bfloat16)                                          # (256, 128)
    w3p = jnp.pad(w3, ((0, 0), (0, HID3_PAD - HID3))).astype(jnp.bfloat16)  # (128, 128)
    b3p = jnp.pad(b3, ((0, 0), (0, HID3_PAD - HID3)))                      # (1, 128)
    w4p = jnp.pad(w4, ((0, HID3_PAD - HID3),
                       (0, OUT_PAD - OUT_CLASSES))).astype(jnp.bfloat16)   # (128, 128)
    # pre-poison padded class lanes: zero w4 cols + (-1e30) bias -> logits = -1e30
    b4p = jnp.pad(b4, ((0, 0), (0, OUT_PAD - OUT_CLASSES)),
                  constant_values=-1e30)                                   # (1, 128)

    resident = lambda i: (0, 0)   # weights/biases: same block every step -> stay in VMEM

    flops = 2 * B_pad * (IN_FEATURES * HID1 + HID1 * HID2
                         + HID2 * HID3_PAD + HID3_PAD * OUT_PAD)
    bytes_accessed = (x.size * 4
                      + (w1p.size + w2p.size + w3p.size + w4p.size) * 2
                      + (b1.size + b2.size + b3p.size + b4p.size) * 4
                      + B_pad * OUT_PAD * 4)

    out = pl.pallas_call(
        mlp_kernel,
        out_shape=jax.ShapeDtypeStruct((B_pad, OUT_PAD), jnp.float32),
        grid=(B_pad // TB,),
        in_specs=[
            # x tile, pipelined over batch; last dim 784 == full array dim (legal)
            pl.BlockSpec((TB, IN_FEATURES), lambda i: (i, 0)),
            pl.BlockSpec((IN_FEATURES, HID1), resident),
            pl.BlockSpec((1, HID1), resident),
            pl.BlockSpec((HID1, HID2), resident),
            pl.BlockSpec((1, HID2), resident),
            pl.BlockSpec((HID2, HID3_PAD), resident),
            pl.BlockSpec((1, HID3_PAD), resident),
            pl.BlockSpec((HID3_PAD, OUT_PAD), resident),
            pl.BlockSpec((1, OUT_PAD), resident),
        ],
        out_specs=pl.BlockSpec((TB, OUT_PAD), lambda i: (i, 0)),
        compiler_params=pltpu.CompilerParams(
            dimension_semantics=("parallel",),        # v7x: shard batch across 2 TCs
            vmem_limit_bytes=48 * 1024 * 1024,        # <= v7x 64 MiB physical; ample v5e/v6e
        ),
        cost_estimate=pl.CostEstimate(
            flops=flops,
            transcendentals=B_pad * OUT_PAD,
            bytes_accessed=bytes_accessed,
        ),
    )(x, w1p, b1, w2p, b2, w3p, b3p, w4p, b4p)

    return out[:B, :OUT_CLASSES]


def init_linear(key, fan_in, fan_out):
    """Deterministic PyTorch-style init: U(-1/sqrt(fan_in), 1/sqrt(fan_in))."""
    kw, kb = jax.random.split(key)
    bound = 1.0 / jnp.sqrt(jnp.float32(fan_in))
    # stored as (in, out) so the kernel computes x @ W
    w = jax.random.uniform(kw, (fan_in, fan_out), jnp.float32, -bound, bound)
    b = jax.random.uniform(kb, (1, fan_out), jnp.float32, -bound, bound)
    return w, b


if __name__ == "__main__":
    key = jax.random.PRNGKey(0)
    k_x, k1, k2, k3, k4 = jax.random.split(key, 5)

    # small batch of MNIST-shaped inputs, NCHW like the PyTorch module expects
    B = 8
    x = jax.random.normal(k_x, (B, 1, 28, 28), jnp.float32)

    params = (
        init_linear(k1, 784, 256),
        init_linear(k2, 256, 128),
        init_linear(k3, 128, 64),
        init_linear(k4, 64, 10),
    )

    probs = network_forward(x, params)
    jax.block_until_ready(probs)

    # pure-JAX reference with the same bf16 dot inputs / f32 accumulation
    def ref_forward(x_nchw, params):
        def lin(h, w, b):
            return jnp.dot(h.astype(jnp.bfloat16), w.astype(jnp.bfloat16),
                           preferred_element_type=jnp.float32) + b
        (w1, b1), (w2, b2), (w3, b3), (w4, b4) = params
        h = x_nchw.reshape(x_nchw.shape[0], -1)
        h = jnp.maximum(lin(h, w1, b1), 0.0)
        h = jnp.maximum(lin(h, w2, b2), 0.0)
        h = jnp.maximum(lin(h, w3, b3), 0.0)
        return jax.nn.softmax(lin(h, w4, b4), axis=-1)

    ref = ref_forward(x, params)

    assert probs.shape == (B, 10)
    row_sums = jnp.sum(probs, axis=1)
    assert bool(jnp.all(jnp.abs(row_sums - 1.0) < 1e-3))       # exact-divide softmax
    assert bool(jnp.max(jnp.abs(probs - ref)) < 5e-3)

    print("KERNEL_OK")
</pallas_src>

<mosaic_0001>
module attributes {stable_mosaic.version = 11 : i64} {
  func.func @mlp_kernel(%arg0: i32, %arg1: memref<8x784xf32, #tpu.memory_space<vmem>>, %arg2: memref<784x256xbf16, #tpu.memory_space<vmem>>, %arg3: memref<1x256xf32, #tpu.memory_space<vmem>>, %arg4: memref<256x128xbf16, #tpu.memory_space<vmem>>, %arg5: memref<1x128xf32, #tpu.memory_space<vmem>>, %arg6: memref<128x128xbf16, #tpu.memory_space<vmem>>, %arg7: memref<1x128xf32, #tpu.memory_space<vmem>>, %arg8: memref<128x128xbf16, #tpu.memory_space<vmem>>, %arg9: memref<1x128xf32, #tpu.memory_space<vmem>>, %arg10: memref<8x128xf32, #tpu.memory_space<vmem>>) attributes {dimension_semantics = [#tpu.dimension_semantics<parallel>], iteration_bounds = array<i64: 1>, scalar_prefetch = 0 : i64, scratch_operands = 0 : i64, tpu.core_type = #tpu.core_type<tc>, window_params = [{transform_indices = @transform_0, window_bounds = array<i64: 8, 784>}, {pipeline_mode = #tpu.pipeline_mode<synchronous>, transform_indices = @transform_1, window_bounds = array<i64: 784, 256>}, {pipeline_mode = #tpu.pipeline_mode<synchronous>, transform_indices = @transform_2, window_bounds = array<i64: 1, 256>}, {pipeline_mode = #tpu.pipeline_mode<synchronous>, transform_indices = @transform_3, window_bounds = array<i64: 256, 128>}, {pipeline_mode = #tpu.pipeline_mode<synchronous>, transform_indices = @transform_4, window_bounds = array<i64: 1, 128>}, {pipeline_mode = #tpu.pipeline_mode<synchronous>, transform_indices = @transform_5, window_bounds = array<i64: 128, 128>}, {pipeline_mode = #tpu.pipeline_mode<synchronous>, transform_indices = @transform_6, window_bounds = array<i64: 1, 128>}, {pipeline_mode = #tpu.pipeline_mode<synchronous>, transform_indices = @transform_7, window_bounds = array<i64: 128, 128>}, {pipeline_mode = #tpu.pipeline_mode<synchronous>, transform_indices = @transform_8, window_bounds = array<i64: 1, 128>}, {transform_indices = @transform_9, window_bounds = array<i64: 8, 128>}]} {
    %c0 = arith.constant 0 : index
    %c0_0 = arith.constant 0 : index
    %0 = vector.load %arg1[%c0, %c0_0] : memref<8x784xf32, #tpu.memory_space<vmem>>, vector<8x784xf32>
    %1 = arith.truncf %0 : vector<8x784xf32> to vector<8x784xbf16>
    %c0_1 = arith.constant 0 : index
    %c0_2 = arith.constant 0 : index
    %2 = vector.load %arg2[%c0_1, %c0_2] : memref<784x256xbf16, #tpu.memory_space<vmem>>, vector<784x256xbf16>
    %cst = arith.constant dense<0.000000e+00> : vector<8x256xf32>
    %3 = tpu.matmul %1, %2, %cst {dimension_numbers = #tpu.dot_dimension_numbers<[1], [0], [0], [1], [0, 0, 1, 1], [], []>} : vector<8x784xbf16>, vector<784x256xbf16>, vector<8x256xf32> -> vector<8x256xf32>
    %c0_3 = arith.constant 0 : index
    %c0_4 = arith.constant 0 : index
    %4 = vector.load %arg3[%c0_3, %c0_4] : memref<1x256xf32, #tpu.memory_space<vmem>>, vector<1x256xf32>
    %5 = vector.broadcast %4 : vector<1x256xf32> to vector<8x256xf32>
    %6 = arith.addf %3, %5 : vector<8x256xf32>
    %cst_5 = arith.constant 0.000000e+00 : f32
    %7 = vector.broadcast %cst_5 : f32 to vector<8x256xf32>
    %8 = arith.maximumf %6, %7 : vector<8x256xf32>
    %9 = arith.truncf %8 : vector<8x256xf32> to vector<8x256xbf16>
    %c0_6 = arith.constant 0 : index
    %c0_7 = arith.constant 0 : index
    %10 = vector.load %arg4[%c0_6, %c0_7] : memref<256x128xbf16, #tpu.memory_space<vmem>>, vector<256x128xbf16>
    %cst_8 = arith.constant dense<0.000000e+00> : vector<8x128xf32>
    %11 = tpu.matmul %9, %10, %cst_8 {dimension_numbers = #tpu.dot_dimension_numbers<[1], [0], [0], [1], [0, 0, 1, 1], [], []>} : vector<8x256xbf16>, vector<256x128xbf16>, vector<8x128xf32> -> vector<8x128xf32>
    %c0_9 = arith.constant 0 : index
    %c0_10 = arith.constant 0 : index
    %12 = vector.load %arg5[%c0_9, %c0_10] : memref<1x128xf32, #tpu.memory_space<vmem>>, vector<1x128xf32>
    %13 = vector.broadcast %12 : vector<1x128xf32> to vector<8x128xf32>
    %14 = arith.addf %11, %13 : vector<8x128xf32>
    %cst_11 = arith.constant 0.000000e+00 : f32
    %15 = vector.broadcast %cst_11 : f32 to vector<8x128xf32>
    %16 = arith.maximumf %14, %15 : vector<8x128xf32>
    %17 = arith.truncf %16 : vector<8x128xf32> to vector<8x128xbf16>
    %c0_12 = arith.constant 0 : index
    %c0_13 = arith.constant 0 : index
    %18 = vector.load %arg6[%c0_12, %c0_13] : memref<128x128xbf16, #tpu.memory_space<vmem>>, vector<128x128xbf16>
    %cst_14 = arith.constant dense<0.000000e+00> : vector<8x128xf32>
    %19 = tpu.matmul %17, %18, %cst_14 {dimension_numbers = #tpu.dot_dimension_numbers<[1], [0], [0], [1], [0, 0, 1, 1], [], []>} : vector<8x128xbf16>, vector<128x128xbf16>, vector<8x128xf32> -> vector<8x128xf32>
    %c0_15 = arith.constant 0 : index
    %c0_16 = arith.constant 0 : index
    %20 = vector.load %arg7[%c0_15, %c0_16] : memref<1x128xf32, #tpu.memory_space<vmem>>, vector<1x128xf32>
    %21 = vector.broadcast %20 : vector<1x128xf32> to vector<8x128xf32>
    %22 = arith.addf %19, %21 : vector<8x128xf32>
    %cst_17 = arith.constant 0.000000e+00 : f32
    %23 = vector.broadcast %cst_17 : f32 to vector<8x128xf32>
    %24 = arith.maximumf %22, %23 : vector<8x128xf32>
    %25 = arith.truncf %24 : vector<8x128xf32> to vector<8x128xbf16>
    %c0_18 = arith.constant 0 : index
    %c0_19 = arith.constant 0 : index
    %26 = vector.load %arg8[%c0_18, %c0_19] : memref<128x128xbf16, #tpu.memory_space<vmem>>, vector<128x128xbf16>
    %cst_20 = arith.constant dense<0.000000e+00> : vector<8x128xf32>
    %27 = tpu.matmul %25, %26, %cst_20 {dimension_numbers = #tpu.dot_dimension_numbers<[1], [0], [0], [1], [0, 0, 1, 1], [], []>} : vector<8x128xbf16>, vector<128x128xbf16>, vector<8x128xf32> -> vector<8x128xf32>
    %c0_21 = arith.constant 0 : index
    %c0_22 = arith.constant 0 : index
    %28 = vector.load %arg9[%c0_21, %c0_22] : memref<1x128xf32, #tpu.memory_space<vmem>>, vector<1x128xf32>
    %29 = vector.broadcast %28 : vector<1x128xf32> to vector<8x128xf32>
    %30 = arith.addf %27, %29 : vector<8x128xf32>
    %cst_23 = arith.constant dense<0xFF800000> : vector<8xf32>
    %31 = vector.multi_reduction <maximumf>, %30, %cst_23 [1] : vector<8x128xf32> to vector<8xf32>
    %32 = vector.shape_cast %31 : vector<8xf32> to vector<8x1xf32>
    %33 = vector.broadcast %32 : vector<8x1xf32> to vector<8x128xf32>
    %34 = arith.subf %30, %33 : vector<8x128xf32>
    %35 = math.exp %34 : vector<8x128xf32>
    %cst_24 = arith.constant dense<0.000000e+00> : vector<8xf32>
    %36 = vector.multi_reduction <add>, %35, %cst_24 [1] : vector<8x128xf32> to vector<8xf32>
    %37 = vector.shape_cast %36 : vector<8xf32> to vector<8x1xf32>
    %38 = vector.broadcast %37 : vector<8x1xf32> to vector<8x128xf32>
    %39 = arith.divf %35, %38 : vector<8x128xf32>
    %c0_25 = arith.constant 0 : index
    %c0_26 = arith.constant 0 : index
    %40 = vector.load %arg10[%c0_25, %c0_26] : memref<8x128xf32, #tpu.memory_space<vmem>>, vector<8x128xf32>
    tpu.vector_store %arg10[%c0_25, %c0_26], %39 {strides = array<i32>} : memref<8x128xf32, #tpu.memory_space<vmem>>, vector<8x128xf32>,
    return
  }
  func.func @transform_0(%arg0: i32) -> (i32, i32) {
    %c0_i32 = arith.constant 0 : i32
    %c0_i32_0 = arith.constant 0 : i32
    return %arg0, %c0_i32 : i32, i32
  }
  func.func @transform_1(%arg0: i32) -> (i32, i32) {
    %c0_i32 = arith.constant 0 : i32
    %c0_i32_0 = arith.constant 0 : i32
    %c0_i32_1 = arith.constant 0 : i32
    return %c0_i32, %c0_i32_0 : i32, i32
  }
  func.func @transform_2(%arg0: i32) -> (i32, i32) {
    %c0_i32 = arith.constant 0 : i32
    %c0_i32_0 = arith.constant 0 : i32
    %c0_i32_1 = arith.constant 0 : i32
    return %c0_i32, %c0_i32_0 : i32, i32
  }
  func.func @transform_3(%arg0: i32) -> (i32, i32) {
    %c0_i32 = arith.constant 0 : i32
    %c0_i32_0 = arith.constant 0 : i32
    %c0_i32_1 = arith.constant 0 : i32
    return %c0_i32, %c0_i32_0 : i32, i32
  }
  func.func @transform_4(%arg0: i32) -> (i32, i32) {
    %c0_i32 = arith.constant 0 : i32
    %c0_i32_0 = arith.constant 0 : i32
    %c0_i32_1 = arith.constant 0 : i32
    return %c0_i32, %c0_i32_0 : i32, i32
  }
  func.func @transform_5(%arg0: i32) -> (i32, i32) {
    %c0_i32 = arith.constant 0 : i32
    %c0_i32_0 = arith.constant 0 : i32
    %c0_i32_1 = arith.constant 0 : i32
    return %c0_i32, %c0_i32_0 : i32, i32
  }
  func.func @transform_6(%arg0: i32) -> (i32, i32) {
    %c0_i32 = arith.constant 0 : i32
    %c0_i32_0 = arith.constant 0 : i32
    %c0_i32_1 = arith.constant 0 : i32
    return %c0_i32, %c0_i32_0 : i32, i32
  }
  func.func @transform_7(%arg0: i32) -> (i32, i32) {
    %c0_i32 = arith.constant 0 : i32
    %c0_i32_0 = arith.constant 0 : i32
    %c0_i32_1 = arith.constant 0 : i32
    return %c0_i32, %c0_i32_0 : i32, i32
  }
  func.func @transform_8(%arg0: i32) -> (i32, i32) {
    %c0_i32 = arith.constant 0 : i32
    %c0_i32_0 = arith.constant 0 : i32
    %c0_i32_1 = arith.constant 0 : i32
    return %c0_i32, %c0_i32_0 : i32, i32
  }
  func.func @transform_9(%arg0: i32) -> (i32, i32) {
    %c0_i32 = arith.constant 0 : i32
    %c0_i32_0 = arith.constant 0 : i32
    return %arg0, %c0_i32 : i32, i32
  }
}

</mosaic_0001>

<llo_original>
// kernel: tpu_custom_call.1
$region0: #{tpu_custom_call.1}
  #allocation0 [shape = 'u32[]', space=smem, size = 0x4, offset = 0x4, fixed_abs, tag = 'smem constant byte address 0x4 - core index']
  #allocation1 [shape = 'u32[72,128]{1,0:T(1,128)}', space=vmem, size = 0x9000, scoped, tag = 'internal scratch']
  %s0 = inlined_call_operand.hbm [shape: f32[8,784], index: 0, kind: input, shape index: {}]
  %s1 = inlined_call_operand.hbm [shape: bf16[784,256], index: 1, kind: input, shape index: {}]
  %s2 = inlined_call_operand.hbm [shape: f32[1,256], index: 2, kind: input, shape index: {}]
  %s3 = inlined_call_operand.hbm [shape: bf16[256,128], index: 3, kind: input, shape index: {}]
  %s4 = inlined_call_operand.vmem [shape: f32[1,128], index: 4, kind: input, shape index: {}]
  %s5 = inlined_call_operand.hbm [shape: bf16[128,128], index: 5, kind: input, shape index: {}]
  %s6 = inlined_call_operand.vmem [shape: f32[1,128], index: 6, kind: input, shape index: {}]
  %s7 = inlined_call_operand.hbm [shape: bf16[128,128], index: 7, kind: input, shape index: {}]
  %s8 = inlined_call_operand.vmem [shape: f32[1,128], index: 8, kind: input, shape index: {}]
  %s9 = inlined_call_operand.hbm [shape: f32[8,128], index: 9, kind: output, shape index: {}]
  %s10 = sld [smem:[#allocation0]]
  $region70: #{tpu_custom_call.1} parent=0
    _
  %s12 = ssub.s32 1, %s10
  %s13 = scalar_select 0, %s12, %s10
  $region1: #{tpu_custom_call.1} parent=0
    #allocation2 [shape = 'u8[28672]{0}', space=vmem, size = 0x7000, scoped, tag = 'input window, operand 0, single buffered']
    #allocation3 [shape = 's32[1]{0}', space=sflag, size = 0x4, scoped, tag = 'scoped memory for tpu_custom_call.1']
    #allocation4 [shape = 's32[1]{0}', space=sflag, size = 0x4, scoped, tag = 'scoped memory for tpu_custom_call.1']
    #allocation5 [shape = 'u8[401408]{0}', space=vmem, size = 0x62000, scoped, tag = 'input window, operand 1, single buffered']
    #allocation6 [shape = 's32[1]{0}', space=sflag, size = 0x4, scoped, tag = 'scoped memory for tpu_custom_call.1']
    #allocation7 [shape = 'u8[1024]{0}', space=vmem, size = 0x400, scoped, tag = 'input window, operand 2, single buffered']
    #allocation8 [shape = 'u8[65536]{0}', space=vmem, size = 0x10000, scoped, tag = 'input window, operand 3, single buffered']
    #allocation9 [shape = 's32[1]{0}', space=sflag, size = 0x4, scoped, tag = 'scoped memory for tpu_custom_call.1']
    #allocation10 [shape = 'u8[32768]{0}', space=vmem, size = 0x8000, scoped, tag = 'input window, operand 5, single buffered']
    #allocation11 [shape = 'u8[32768]{0}', space=vmem, size = 0x8000, scoped, tag = 'input window, operand 7, single buffered']
    #allocation12 [shape = 's32[1]{0}', space=sflag, size = 0x4, scoped, tag = 'scoped memory for tpu_custom_call.1']
    #allocation13 [shape = 'u8[4096]{0}', space=vmem, size = 0x1000, scoped, tag = 'output window, operand 0, single buffered']
    %14 = vsyncpa [#allocation3], 0
    %15 = vsyncpa [#allocation6], 0
    %16 = vsyncpa [#allocation9], 0
    %17 = vsyncpa [#allocation12], 0
    %18 = vsyncpa [#allocation4], 0
    // Predicated region
    $region2: #{tpu_custom_call.1} parent=1 // pred_check
      _
    $region3: #{tpu_custom_call.1} parent=1 // pred_check_branch
      %20 = sbr.rel (0) target = $region5
    $region4: #{tpu_custom_call.1} parent=1 // pred_region
      %22 = vsyncadd [#allocation3], 0
      %s24 = sshll.u32 %s0, 4
      %s25 = int_to_ptr.hbm [resolvable:$true] %s24
      %s26 = sshll.u32 [#allocation2], 4
      %s27 = int_to_ptr.vmem [resolvable:$true] %s26
      %29 = dma.hbm_to_vmem [thread:$0]  %s25, 896, %s27, [#allocation3]
    $region5: #{tpu_custom_call.1} parent=1 // pred_fallthru
      _
    // Predicated region
    $region6: #{tpu_custom_call.1} parent=1 // pred_check
      _
    $region7: #{tpu_custom_call.1} parent=1 // pred_check_branch
      %31 = sbr.rel (0) target = $region9
    $region8: #{tpu_custom_call.1} parent=1 // pred_region
      %33 = vsyncadd [#allocation6], 0
      %s34 = sshll.u32 %s1, 4
      %s35 = int_to_ptr.hbm [resolvable:$true] %s34
      %s36 = sshll.u32 [#allocation5], 4
      %s37 = int_to_ptr.vmem [resolvable:$true] %s36
      %42 = dma.hbm_to_vmem [thread:$0]  %s35, 12544, %s37, [#allocation6], 128, 128, 8
    $region9: #{tpu_custom_call.1} parent=1 // pred_fallthru
      _
    // Predicated region
    $region10: #{tpu_custom_call.1} parent=1 // pred_check
      _
    $region11: #{tpu_custom_call.1} parent=1 // pred_check_branch
      %44 = sbr.rel (0) target = $region13
    $region12: #{tpu_custom_call.1} parent=1 // pred_region
      %46 = vsyncadd [#allocation6], 0
      %s48 = sshll.u32 %s2, 4
      %s49 = int_to_ptr.hbm [resolvable:$true] %s48
      %s50 = sshll.u32 [#allocation7], 4
      %s51 = int_to_ptr.vmem [resolvable:$true] %s50
      %53 = dma.hbm_to_vmem [thread:$0]  %s49, 32, %s51, [#allocation6]
    $region13: #{tpu_custom_call.1} parent=1 // pred_fallthru
      _
    // Predicated region
    $region14: #{tpu_custom_call.1} parent=1 // pred_check
      _
    $region15: #{tpu_custom_call.1} parent=1 // pred_check_branch
      %55 = sbr.rel (0) target = $region17
    $region16: #{tpu_custom_call.1} parent=1 // pred_region
      %57 = vsyncadd [#allocation9], 0
      %s58 = sshll.u32 %s3, 4
      %s59 = int_to_ptr.hbm [resolvable:$true] %s58
      %s60 = sshll.u32 [#allocation8], 4
      %s61 = int_to_ptr.vmem [resolvable:$true] %s60
      %66 = dma.hbm_to_vmem [thread:$0]  %s59, 2048, %s61, [#allocation9], 64, 64, 4
    $region17: #{tpu_custom_call.1} parent=1 // pred_fallthru
      _
    // Predicated region
    $region18: #{tpu_custom_call.1} parent=1 // pred_check
      _
    $region19: #{tpu_custom_call.1} parent=1 // pred_check_branch
      %68 = sbr.rel (0) target = $region21
    $region20: #{tpu_custom_call.1} parent=1 // pred_region
      _
    $region21: #{tpu_custom_call.1} parent=1 // pred_fallthru
      _
    // Predicated region
    $region22: #{tpu_custom_call.1} parent=1 // pred_check
      _
    $region23: #{tpu_custom_call.1} parent=1 // pred_check_branch
      %70 = sbr.rel (0) target = $region25
    $region24: #{tpu_custom_call.1} parent=1 // pred_region
      %72 = vsyncadd [#allocation9], 0
      %s73 = sshll.u32 %s5, 4
      %s74 = int_to_ptr.hbm [resolvable:$true] %s73
      %s75 = sshll.u32 [#allocation10], 4
      %s76 = int_to_ptr.vmem [resolvable:$true] %s75
      %81 = dma.hbm_to_vmem [thread:$0]  %s74, 1024, %s76, [#allocation9], 64, 64, 4
    $region25: #{tpu_custom_call.1} parent=1 // pred_fallthru
      _
    // Predicated region
    $region26: #{tpu_custom_call.1} parent=1 // pred_check
      _
    $region27: #{tpu_custom_call.1} parent=1 // pred_check_branch
      %83 = sbr.rel (0) target = $region29
    $region28: #{tpu_custom_call.1} parent=1 // pred_region
      _
    $region29: #{tpu_custom_call.1} parent=1 // pred_fallthru
      _
    // Predicated region
    $region30: #{tpu_custom_call.1} parent=1 // pred_check
      _
    $region31: #{tpu_custom_call.1} parent=1 // pred_check_branch
      %85 = sbr.rel (0) target = $region33
    $region32: #{tpu_custom_call.1} parent=1 // pred_region
      %87 = vsyncadd [#allocation12], 0
      %s88 = sshll.u32 %s7, 4
      %s89 = int_to_ptr.hbm [resolvable:$true] %s88
      %s90 = sshll.u32 [#allocation11], 4
      %s91 = int_to_ptr.vmem [resolvable:$true] %s90
      %96 = dma.hbm_to_vmem [thread:$0]  %s89, 1024, %s91, [#allocation12], 64, 64, 4
    $region33: #{tpu_custom_call.1} parent=1 // pred_fallthru
      _
    // Predicated region
    $region34: #{tpu_custom_call.1} parent=1 // pred_check
      _
    $region35: #{tpu_custom_call.1} parent=1 // pred_check_branch
      %98 = sbr.rel (0) target = $region37
    $region36: #{tpu_custom_call.1} parent=1 // pred_region
      _
    $region37: #{tpu_custom_call.1} parent=1 // pred_fallthru
      _
    // Predicated region
    $region38: #{tpu_custom_call.1} parent=1 // pred_check
      _
    $region39: #{tpu_custom_call.1} parent=1 // pred_check_branch
      %100 = sbr.rel (0) target = $region41
    $region40: #{tpu_custom_call.1} parent=1 // pred_region
      %102 = dma.done [#allocation3], 896
    $region41: #{tpu_custom_call.1} parent=1 // pred_fallthru
      _
    // Predicated region
    $region42: #{tpu_custom_call.1} parent=1 // pred_check
      _
    $region43: #{tpu_custom_call.1} parent=1 // pred_check_branch
      %104 = sbr.rel (0) target = $region45
    $region44: #{tpu_custom_call.1} parent=1 // pred_region
      %106 = dma.done [#allocation6], 12544
    $region45: #{tpu_custom_call.1} parent=1 // pred_fallthru
      _
    // Predicated region
    $region46: #{tpu_custom_call.1} parent=1 // pred_check
      _
    $region47: #{tpu_custom_call.1} parent=1 // pred_check_branch
      %108 = sbr.rel (0) target = $region49
    $region48: #{tpu_custom_call.1} parent=1 // pred_region
      %110 = dma.done [#allocation6], 32
    $region49: #{tpu_custom_call.1} parent=1 // pred_fallthru
      _
    // Predicated region
    $region50: #{tpu_custom_call.1} parent=1 // pred_check
      _
    $region51: #{tpu_custom_call.1} parent=1 // pred_check_branch
      %112 = sbr.rel (0) target = $region53
    $region52: #{tpu_custom_call.1} parent=1 // pred_region
      %114 = dma.done [#allocation9], 2048
    $region53: #{tpu_custom_call.1} parent=1 // pred_fallthru
      _
    // Predicated region
    $region54: #{tpu_custom_call.1} parent=1 // pred_check
      _
    $region55: #{tpu_custom_call.1} parent=1 // pred_check_branch
      %116 = sbr.rel (0) target = $region57
    $region56: #{tpu_custom_call.1} parent=1 // pred_region
      %118 = dma.done [#allocation9], 1024
    $region57: #{tpu_custom_call.1} parent=1 // pred_fallthru
      _
    // Predicated region
    $region58: #{tpu_custom_call.1} parent=1 // pred_check
      _
    $region59: #{tpu_custom_call.1} parent=1 // pred_check_branch
      %120 = sbr.rel (0) target = $region61
    $region60: #{tpu_custom_call.1} parent=1 // pred_region
      %122 = dma.done [#allocation12], 1024
    $region61: #{tpu_custom_call.1} parent=1 // pred_fallthru
      _
    %v124 = vld [vmem:[#allocation2] sm:$0xff]
    %v125 = vld [vmem:[#allocation2 + $0x8] sm:$0xff]
    %v126 = vld [vmem:[#allocation2 + $0x10] sm:$0xff]
    %v127 = vld [vmem:[#allocation2 + $0x18] sm:$0xff]
    %v128 = vld [vmem:[#allocation2 + $0x20] sm:$0xff]
    %v129 = vld [vmem:[#allocation2 + $0x28] sm:$0xff]
    %v130 = vld [vmem:[#allocation2 + $0x30] sm:$0xff]
    %v131 = vpack.c.bf16 %v124, %v124
    %v132 = vpack.c.bf16 %v125, %v125
    %v133 = vpack.c.bf16 %v126, %v126
    %v134 = vpack.c.bf16 %v127, %v127
    %v135 = vpack.c.bf16 %v128, %v128
    %v136 = vpack.c.bf16 %v129, %v129
    %v137 = vpack.c.bf16 %v130, %v130
    %v138 = vld [vmem:[#allocation5] sm:$0xff]
    %v139 = vld [vmem:[#allocation5 + $0x8] sm:$0xff]
    %v140 = vld [vmem:[#allocation5 + $0x10] sm:$0xff]
    %v141 = vld [vmem:[#allocation5 + $0x18] sm:$0xff]
    %v142 = vld [vmem:[#allocation5 + $0x20] sm:$0xff]
    %v143 = vld [vmem:[#allocation5 + $0x28] sm:$0xff]
    %v144 = vld [vmem:[#allocation5 + $0x30] sm:$0xff]
    %v145 = vld [vmem:[#allocation5 + $0x38] sm:$0xff]
    %v146 = vld [vmem:[#allocation5 + $0x40] sm:$0xff]
    %v147 = vld [vmem:[#allocation5 + $0x48] sm:$0xff]
    %v148 = vld [vmem:[#allocation5 + $0x50] sm:$0xff]
    %v149 = vld [vmem:[#allocation5 + $0x58] sm:$0xff]
    %v150 = vld [vmem:[#allocation5 + $0x60] sm:$0xff]
    %v151 = vld [vmem:[#allocation5 + $0x68] sm:$0xff]
    %v152 = vld [vmem:[#allocation5 + $0x70] sm:$0xff]
    %v153 = vld [vmem:[#allocation5 + $0x78] sm:$0xff]
    %v154 = vld [vmem:[#allocation5 + $0x80] sm:$0xff]
    %v155 = vld [vmem:[#allocation5 + $0x88] sm:$0xff]
    %v156 = vld [vmem:[#allocation5 + $0x90] sm:$0xff]
    %v157 = vld [vmem:[#allocation5 + $0x98] sm:$0xff]
    %v158 = vld [vmem:[#allocation5 + $0xa0] sm:$0xff]
    %v159 = vld [vmem:[#allocation5 + $0xa8] sm:$0xff]
    %v160 = vld [vmem:[#allocation5 + $0xb0] sm:$0xff]
    %v161 = vld [vmem:[#allocation5 + $0xb8] sm:$0xff]
    %v162 = vld [vmem:[#allocation5 + $0xc0] sm:$0xff]
    %v163 = vld [vmem:[#allocation5 + $0xc8] sm:$0xff]
    %v164 = vld [vmem:[#allocation5 + $0xd0] sm:$0xff]
    %v165 = vld [vmem:[#allocation5 + $0xd8] sm:$0xff]
    %v166 = vld [vmem:[#allocation5 + $0xe0] sm:$0xff]
    %v167 = vld [vmem:[#allocation5 + $0xe8] sm:$0xff]
    %v168 = vld [vmem:[#allocation5 + $0xf0] sm:$0xff]
    %v169 = vld [vmem:[#allocation5 + $0xf8] sm:$0xff]
    %v170 = vld [vmem:[#allocation5 + $0x100] sm:$0xff]
    %v171 = vld [vmem:[#allocation5 + $0x108] sm:$0xff]
    %v172 = vld [vmem:[#allocation5 + $0x110] sm:$0xff]
    %v173 = vld [vmem:[#allocation5 + $0x118] sm:$0xff]
    %v174 = vld [vmem:[#allocation5 + $0x120] sm:$0xff]
    %v175 = vld [vmem:[#allocation5 + $0x128] sm:$0xff]
    %v176 = vld [vmem:[#allocation5 + $0x130] sm:$0xff]
    %v177 = vld [vmem:[#allocation5 + $0x138] sm:$0xff]
    %v178 = vld [vmem:[#allocation5 + $0x140] sm:$0xff]
    %v179 = vld [vmem:[#allocation5 + $0x148] sm:$0xff]
    %v180 = vld [vmem:[#allocation5 + $0x150] sm:$0xff]
    %v181 = vld [vmem:[#allocation5 + $0x158] sm:$0xff]
    %v182 = vld [vmem:[#allocation5 + $0x160] sm:$0xff]
    %v183 = vld [vmem:[#allocation5 + $0x168] sm:$0xff]
    %v184 = vld [vmem:[#allocation5 + $0x170] sm:$0xff]
    %v185 = vld [vmem:[#allocation5 + $0x178] sm:$0xff]
    %v186 = vld [vmem:[#allocation5 + $0x180] sm:$0xff]
    %v187 = vld [vmem:[#allocation5 + $0x188] sm:$0xff]
    %v188 = vld [vmem:[#allocation5 + $0x190] sm:$0xff]
    %v189 = vld [vmem:[#allocation5 + $0x198] sm:$0xff]
    %v190 = vld [vmem:[#allocation5 + $0x1a0] sm:$0xff]
    %v191 = vld [vmem:[#allocation5 + $0x1a8] sm:$0xff]
    %v192 = vld [vmem:[#allocation5 + $0x1b0] sm:$0xff]
    %v193 = vld [vmem:[#allocation5 + $0x1b8] sm:$0xff]
    %v194 = vld [vmem:[#allocation5 + $0x1c0] sm:$0xff]
    %v195 = vld [vmem:[#allocation5 + $0x1c8] sm:$0xff]
    %v196 = vld [vmem:[#allocation5 + $0x1d0] sm:$0xff]
    %v197 = vld [vmem:[#allocation5 + $0x1d8] sm:$0xff]
    %v198 = vld [vmem:[#allocation5 + $0x1e0] sm:$0xff]
    %v199 = vld [vmem:[#allocation5 + $0x1e8] sm:$0xff]
    %v200 = vld [vmem:[#allocation5 + $0x1f0] sm:$0xff]
    %v201 = vld [vmem:[#allocation5 + $0x1f8] sm:$0xff]
    %v202 = vld [vmem:[#allocation5 + $0x200] sm:$0xff]
    %v203 = vld [vmem:[#allocation5 + $0x208] sm:$0xff]
    %v204 = vld [vmem:[#allocation5 + $0x210] sm:$0xff]
    %v205 = vld [vmem:[#allocation5 + $0x218] sm:$0xff]
    %v206 = vld [vmem:[#allocation5 + $0x220] sm:$0xff]
    %v207 = vld [vmem:[#allocation5 + $0x228] sm:$0xff]
    %v208 = vld [vmem:[#allocation5 + $0x230] sm:$0xff]
    %v209 = vld [vmem:[#allocation5 + $0x238] sm:$0xff]
    %v210 = vld [vmem:[#allocation5 + $0x240] sm:$0xff]
    %v211 = vld [vmem:[#allocation5 + $0x248] sm:$0xff]
    %v212 = vld [vmem:[#allocation5 + $0x250] sm:$0xff]
    %v213 = vld [vmem:[#allocation5 + $0x258] sm:$0xff]
    %v214 = vld [vmem:[#allocation5 + $0x260] sm:$0xff]
    %v215 = vld [vmem:[#allocation5 + $0x268] sm:$0xff]
    %v216 = vld [vmem:[#allocation5 + $0x270] sm:$0xff]
    %v217 = vld [vmem:[#allocation5 + $0x278] sm:$0xff]
    %v218 = vld [vmem:[#allocation5 + $0x280] sm:$0xff]
    %v219 = vld [vmem:[#allocation5 + $0x288] sm:$0xff]
    %v220 = vld [vmem:[#allocation5 + $0x290] sm:$0xff]
    %v221 = vld [vmem:[#allocation5 + $0x298] sm:$0xff]
    %v222 = vld [vmem:[#allocation5 + $0x2a0] sm:$0xff]
    %v223 = vld [vmem:[#allocation5 + $0x2a8] sm:$0xff]
    %v224 = vld [vmem:[#allocation5 + $0x2b0] sm:$0xff]
    %v225 = vld [vmem:[#allocation5 + $0x2b8] sm:$0xff]
    %v226 = vld [vmem:[#allocation5 + $0x2c0] sm:$0xff]
    %v227 = vld [vmem:[#allocation5 + $0x2c8] sm:$0xff]
    %v228 = vld [vmem:[#allocation5 + $0x2d0] sm:$0xff]
    %v229 = vld [vmem:[#allocation5 + $0x2d8] sm:$0xff]
    %v230 = vld [vmem:[#allocation5 + $0x2e0] sm:$0xff]
    %v231 = vld [vmem:[#allocation5 + $0x2e8] sm:$0xff]
    %v232 = vld [vmem:[#allocation5 + $0x2f0] sm:$0xff]
    %v233 = vld [vmem:[#allocation5 + $0x2f8] sm:$0xff]
    %v234 = vld [vmem:[#allocation5 + $0x300] sm:$0xff]
    %v235 = vld [vmem:[#allocation5 + $0x308] sm:$0xff]
    %v236 = vld [vmem:[#allocation7] sm:$0x3]
    %v238 = vperm.slane %v236, 0
    %v239 = vperm.slane %v236, 1
    %v340 = vunpack.c.l.b16 %v138
    %v341 = vunpack.c.h.b16 %v138
    %v342 = vunpack.c.l.b16 %v139
    %v343 = vunpack.c.h.b16 %v139
    %v344 = vunpack.c.l.b16 %v140
    %v345 = vunpack.c.h.b16 %v140
    %v346 = vunpack.c.l.b16 %v141
    %v347 = vunpack.c.h.b16 %v141
    %v348 = vunpack.c.l.b16 %v142
    %v349 = vunpack.c.h.b16 %v142
    %v350 = vunpack.c.l.b16 %v143
    %v351 = vunpack.c.h.b16 %v143
    %v352 = vunpack.c.l.b16 %v144
    %v353 = vunpack.c.h.b16 %v144
    %v354 = vunpack.c.l.b16 %v145
    %v355 = vunpack.c.h.b16 %v145
    %v356 = vunpack.c.l.b16 %v146
    %v357 = vunpack.c.h.b16 %v146
    %v358 = vunpack.c.l.b16 %v147
    %v359 = vunpack.c.h.b16 %v147
    %v360 = vunpack.c.l.b16 %v148
    %v361 = vunpack.c.h.b16 %v148
    %v362 = vunpack.c.l.b16 %v149
    %v363 = vunpack.c.h.b16 %v149
    %v364 = vunpack.c.l.b16 %v150
    %v365 = vunpack.c.h.b16 %v150
    %v366 = vunpack.c.l.b16 %v151
    %v367 = vunpack.c.h.b16 %v151
    %v368 = vunpack.c.l.b16 %v152
    %v369 = vunpack.c.h.b16 %v152
    %v370 = vunpack.c.l.b16 %v153
    %v371 = vunpack.c.h.b16 %v153
    %v372 = vunpack.c.l.b16 %v154
    %v373 = vunpack.c.h.b16 %v154
    %v374 = vunpack.c.l.b16 %v155
    %v375 = vunpack.c.h.b16 %v155
    %v376 = vunpack.c.l.b16 %v156
    %v377 = vunpack.c.h.b16 %v156
    %v378 = vunpack.c.l.b16 %v157
    %v379 = vunpack.c.h.b16 %v157
    %v380 = vunpack.c.l.b16 %v158
    %v381 = vunpack.c.h.b16 %v158
    %v382 = vunpack.c.l.b16 %v159
    %v383 = vunpack.c.h.b16 %v159
    %v384 = vunpack.c.l.b16 %v160
    %v385 = vunpack.c.h.b16 %v160
    %v386 = vunpack.c.l.b16 %v161
    %v387 = vunpack.c.h.b16 %v161
    %v388 = vunpack.c.l.b16 %v162
    %v389 = vunpack.c.h.b16 %v162
    %v390 = vunpack.c.l.b16 %v163
    %v391 = vunpack.c.h.b16 %v163
    %v392 = vunpack.c.l.b16 %v164
    %v393 = vunpack.c.h.b16 %v164
    %v394 = vunpack.c.l.b16 %v165
    %v395 = vunpack.c.h.b16 %v165
    %v396 = vunpack.c.l.b16 %v166
    %v397 = vunpack.c.h.b16 %v166
    %v398 = vunpack.c.l.b16 %v167
    %v399 = vunpack.c.h.b16 %v167
    %v400 = vunpack.c.l.b16 %v168
    %v401 = vunpack.c.h.b16 %v168
    %v402 = vunpack.c.l.b16 %v169
    %v403 = vunpack.c.h.b16 %v169
    %v404 = vunpack.c.l.b16 %v170
    %v405 = vunpack.c.h.b16 %v170
    %v406 = vunpack.c.l.b16 %v171
    %v407 = vunpack.c.h.b16 %v171
    %v408 = vunpack.c.l.b16 %v172
    %v409 = vunpack.c.h.b16 %v172
    %v410 = vunpack.c.l.b16 %v173
    %v411 = vunpack.c.h.b16 %v173
    %v412 = vunpack.c.l.b16 %v174
    %v413 = vunpack.c.h.b16 %v174
    %v414 = vunpack.c.l.b16 %v175
    %v415 = vunpack.c.h.b16 %v175
    %v416 = vunpack.c.l.b16 %v176
    %v417 = vunpack.c.h.b16 %v176
    %v418 = vunpack.c.l.b16 %v177
    %v419 = vunpack.c.h.b16 %v177
    %v420 = vunpack.c.l.b16 %v178
    %v421 = vunpack.c.h.b16 %v178
    %v422 = vunpack.c.l.b16 %v179
    %v423 = vunpack.c.h.b16 %v179
    %v424 = vunpack.c.l.b16 %v180
    %v425 = vunpack.c.h.b16 %v180
    %v426 = vunpack.c.l.b16 %v181
    %v427 = vunpack.c.h.b16 %v181
    %v428 = vunpack.c.l.b16 %v182
    %v429 = vunpack.c.h.b16 %v182
    %v430 = vunpack.c.l.b16 %v183
    %v431 = vunpack.c.h.b16 %v183
    %v432 = vunpack.c.l.b16 %v184
    %v433 = vunpack.c.h.b16 %v184
    %v434 = vunpack.c.l.b16 %v185
    %v435 = vunpack.c.h.b16 %v185
    %v436 = vunpack.c.l.b16 %v186
    %v437 = vunpack.c.h.b16 %v186
    %v438 = vunpack.c.l.b16 %v187
    %v439 = vunpack.c.h.b16 %v187
    %v440 = vunpack.c.l.b16 %v188
    %v441 = vunpack.c.h.b16 %v188
    %v442 = vunpack.c.l.b16 %v189
    %v443 = vunpack.c.h.b16 %v189
    %v444 = vunpack.c.l.b16 %v190
    %v445 = vunpack.c.h.b16 %v190
    %v446 = vunpack.c.l.b16 %v191
    %v447 = vunpack.c.h.b16 %v191
    %v448 = vunpack.c.l.b16 %v192
    %v449 = vunpack.c.h.b16 %v192
    %v450 = vunpack.c.l.b16 %v193
    %v451 = vunpack.c.h.b16 %v193
    %v452 = vunpack.c.l.b16 %v194
    %v453 = vunpack.c.h.b16 %v194
    %v454 = vunpack.c.l.b16 %v195
    %v455 = vunpack.c.h.b16 %v195
    %v456 = vunpack.c.l.b16 %v196
    %v457 = vunpack.c.h.b16 %v196
    %v458 = vunpack.c.l.b16 %v197
    %v459 = vunpack.c.h.b16 %v197
    %v460 = vunpack.c.l.b16 %v198
    %v461 = vunpack.c.h.b16 %v198
    %v462 = vunpack.c.l.b16 %v199
    %v463 = vunpack.c.h.b16 %v199
    %v464 = vunpack.c.l.b16 %v200
    %v465 = vunpack.c.h.b16 %v200
    %v466 = vunpack.c.l.b16 %v201
    %v467 = vunpack.c.h.b16 %v201
    %v468 = vunpack.c.l.b16 %v202
    %v469 = vunpack.c.h.b16 %v202
    %v470 = vunpack.c.l.b16 %v203
    %v471 = vunpack.c.h.b16 %v203
    %v472 = vunpack.c.l.b16 %v204
    %v473 = vunpack.c.h.b16 %v204
    %v474 = vunpack.c.l.b16 %v205
    %v475 = vunpack.c.h.b16 %v205
    %v476 = vunpack.c.l.b16 %v206
    %v477 = vunpack.c.h.b16 %v206
    %v478 = vunpack.c.l.b16 %v207
    %v479 = vunpack.c.h.b16 %v207
    %v480 = vunpack.c.l.b16 %v208
    %v481 = vunpack.c.h.b16 %v208
    %v482 = vunpack.c.l.b16 %v209
    %v483 = vunpack.c.h.b16 %v209
    %v484 = vunpack.c.l.b16 %v210
    %v485 = vunpack.c.h.b16 %v210
    %v486 = vunpack.c.l.b16 %v211
    %v487 = vunpack.c.h.b16 %v211
    %v488 = vunpack.c.l.b16 %v212
    %v489 = vunpack.c.h.b16 %v212
    %v490 = vunpack.c.l.b16 %v213
    %v491 = vunpack.c.h.b16 %v213
    %v492 = vunpack.c.l.b16 %v214
    %v493 = vunpack.c.h.b16 %v214
    %v494 = vunpack.c.l.b16 %v215
    %v495 = vunpack.c.h.b16 %v215
    %v496 = vunpack.c.l.b16 %v216
    %v497 = vunpack.c.h.b16 %v216
    %v498 = vunpack.c.l.b16 %v217
    %v499 = vunpack.c.h.b16 %v217
    %v500 = vunpack.c.l.b16 %v218
    %v501 = vunpack.c.h.b16 %v218
    %v502 = vunpack.c.l.b16 %v219
    %v503 = vunpack.c.h.b16 %v219
    %v504 = vunpack.c.l.b16 %v220
    %v505 = vunpack.c.h.b16 %v220
    %v506 = vunpack.c.l.b16 %v221
    %v507 = vunpack.c.h.b16 %v221
    %v508 = vunpack.c.l.b16 %v222
    %v509 = vunpack.c.h.b16 %v222
    %v510 = vunpack.c.l.b16 %v223
    %v511 = vunpack.c.h.b16 %v223
    %v512 = vunpack.c.l.b16 %v224
    %v513 = vunpack.c.h.b16 %v224
    %v514 = vunpack.c.l.b16 %v225
    %v515 = vunpack.c.h.b16 %v225
    %v516 = vunpack.c.l.b16 %v226
    %v517 = vunpack.c.h.b16 %v226
    %v518 = vunpack.c.l.b16 %v227
    %v519 = vunpack.c.h.b16 %v227
    %v520 = vunpack.c.l.b16 %v228
    %v521 = vunpack.c.h.b16 %v228
    %v522 = vunpack.c.l.b16 %v229
    %v523 = vunpack.c.h.b16 %v229
    %v524 = vunpack.c.l.b16 %v230
    %v525 = vunpack.c.h.b16 %v230
    %v526 = vunpack.c.l.b16 %v231
    %v527 = vunpack.c.h.b16 %v231
    %v528 = vunpack.c.l.b16 %v232
    %v529 = vunpack.c.h.b16 %v232
    %v530 = vunpack.c.l.b16 %v233
    %v531 = vunpack.c.h.b16 %v233
    %v532 = vunpack.c.l.b16 %v234
    %v533 = vunpack.c.h.b16 %v234
    %v534 = vunpack.c.l.b16 %v235
    %v535 = vunpack.c.h.b16 %v235
    %v536 = vpack.c.b16 %v342, %v340
    %v537 = vpack.c.b16 %v343, %v341
    %v538 = vpack.c.b16 %v346, %v344
    %v539 = vpack.c.b16 %v347, %v345
    %v540 = vpack.c.b16 %v350, %v348
    %v541 = vpack.c.b16 %v351, %v349
    %v542 = vpack.c.b16 %v354, %v352
    %v543 = vpack.c.b16 %v355, %v353
    %v544 = vpack.c.b16 %v358, %v356
    %v545 = vpack.c.b16 %v359, %v357
    %v546 = vpack.c.b16 %v362, %v360
    %v547 = vpack.c.b16 %v363, %v361
    %v548 = vpack.c.b16 %v366, %v364
    %v549 = vpack.c.b16 %v367, %v365
    %v550 = vpack.c.b16 %v370, %v368
    %v551 = vpack.c.b16 %v371, %v369
    %v552 = vpack.c.b16 %v374, %v372
    %v553 = vpack.c.b16 %v375, %v373
    %v554 = vpack.c.b16 %v378, %v376
    %v555 = vpack.c.b16 %v379, %v377
    %v556 = vpack.c.b16 %v382, %v380
    %v557 = vpack.c.b16 %v383, %v381
    %v558 = vpack.c.b16 %v386, %v384
    %v559 = vpack.c.b16 %v387, %v385
    %v560 = vpack.c.b16 %v390, %v388
    %v561 = vpack.c.b16 %v391, %v389
    %v562 = vpack.c.b16 %v394, %v392
    %v563 = vpack.c.b16 %v395, %v393
    %v564 = vpack.c.b16 %v398, %v396
    %v565 = vpack.c.b16 %v399, %v397
    %v566 = vpack.c.b16 %v402, %v400
    %v567 = vpack.c.b16 %v403, %v401
    %v568 = vpack.c.b16 %v406, %v404
    %v569 = vpack.c.b16 %v407, %v405
    %v570 = vpack.c.b16 %v410, %v408
    %v571 = vpack.c.b16 %v411, %v409
    %v572 = vpack.c.b16 %v414, %v412
    %v573 = vpack.c.b16 %v415, %v413
    %v574 = vpack.c.b16 %v418, %v416
    %v575 = vpack.c.b16 %v419, %v417
    %v576 = vpack.c.b16 %v422, %v420
    %v577 = vpack.c.b16 %v423, %v421
    %v578 = vpack.c.b16 %v426, %v424
    %v579 = vpack.c.b16 %v427, %v425
    %v580 = vpack.c.b16 %v430, %v428
    %v581 = vpack.c.b16 %v431, %v429
    %v582 = vpack.c.b16 %v434, %v432
    %v583 = vpack.c.b16 %v435, %v433
    %v584 = vpack.c.b16 %v438, %v436
    %v585 = vpack.c.b16 %v439, %v437
    %v586 = vpack.c.b16 %v442, %v440
    %v587 = vpack.c.b16 %v443, %v441
    %v588 = vpack.c.b16 %v446, %v444
    %v589 = vpack.c.b16 %v447, %v445
    %v590 = vpack.c.b16 %v450, %v448
    %v591 = vpack.c.b16 %v451, %v449
    %v592 = vpack.c.b16 %v454, %v452
    %v593 = vpack.c.b16 %v455, %v453
    %v594 = vpack.c.b16 %v458, %v456
    %v595 = vpack.c.b16 %v459, %v457
    %v596 = vpack.c.b16 %v462, %v460
    %v597 = vpack.c.b16 %v463, %v461
    %v598 = vpack.c.b16 %v466, %v464
    %v599 = vpack.c.b16 %v467, %v465
    %v600 = vpack.c.b16 %v470, %v468
    %v601 = vpack.c.b16 %v471, %v469
    %v602 = vpack.c.b16 %v474, %v472
    %v603 = vpack.c.b16 %v475, %v473
    %v604 = vpack.c.b16 %v478, %v476
    %v605 = vpack.c.b16 %v479, %v477
    %v606 = vpack.c.b16 %v482, %v480
    %v607 = vpack.c.b16 %v483, %v481
    %v608 = vpack.c.b16 %v486, %v484
    %v609 = vpack.c.b16 %v487, %v485
    %v610 = vpack.c.b16 %v490, %v488
    %v611 = vpack.c.b16 %v491, %v489
    %v612 = vpack.c.b16 %v494, %v492
    %v613 = vpack.c.b16 %v495, %v493
    %v614 = vpack.c.b16 %v498, %v496
    %v615 = vpack.c.b16 %v499, %v497
    %v616 = vpack.c.b16 %v502, %v500
    %v617 = vpack.c.b16 %v503, %v501
    %v618 = vpack.c.b16 %v506, %v504
    %v619 = vpack.c.b16 %v507, %v505
    %v620 = vpack.c.b16 %v510, %v508
    %v621 = vpack.c.b16 %v511, %v509
    %v622 = vpack.c.b16 %v514, %v512
    %v623 = vpack.c.b16 %v515, %v513
    %v624 = vpack.c.b16 %v518, %v516
    %v625 = vpack.c.b16 %v519, %v517
    %v626 = vpack.c.b16 %v522, %v520
    %v627 = vpack.c.b16 %v523, %v521
    %v628 = vpack.c.b16 %v526, %v524
    %v629 = vpack.c.b16 %v527, %v525
    %v630 = vpack.c.b16 %v530, %v528
    %v631 = vpack.c.b16 %v531, %v529
    %v632 = vpack.c.b16 %v534, %v532
    %v633 = vpack.c.b16 %v535, %v533
    %vm732 = vcmask 130048
    %v734 = vsel %vm732, %v137, 0
    %736 = vmatpush.bf16.msra.mxu0 %v550
    %737 = vmatpush.bf16.msra.mxu0 %v548
    %738 = vmatpush.bf16.msra.mxu0 %v546
    %739 = vmatpush.bf16.msra.mxu0 %v544
    %740 = vmatpush.bf16.msra.mxu0 %v542
    %741 = vmatpush.bf16.msra.mxu0 %v540
    %742 = vmatpush.bf16.msra.mxu0 %v538
    %743 = vmatpush.bf16.msra.mxu0 %v536
    %744 = vmatmul.bf16.gmra.mxu0 %v131
    %v745 = vpop.f32.mrf.mxu0
    %v746 = vadd.f32 %v238, %v745
    %v747 = vpop.f32.mrf.mxu0
    %748 = vdwg.mxu0
    %749 = vmatpush.bf16.msra.mxu0 %v566
    %750 = vmatpush.bf16.msra.mxu0 %v564
    %751 = vmatpush.bf16.msra.mxu0 %v562
    %752 = vmatpush.bf16.msra.mxu0 %v560
    %753 = vmatpush.bf16.msra.mxu0 %v558
    %754 = vmatpush.bf16.msra.mxu0 %v556
    %755 = vmatpush.bf16.msra.mxu0 %v554
    %756 = vmatpush.bf16.msra.mxu0 %v552
    %757 = vmatmul.bf16.gmra.mxu0 %v132
    %v758 = vpop.f32.mrf.mxu0
    %v759 = vadd.f32 %v746, %v758
    %v760 = vpop.f32.mrf.mxu0
    %761 = vdwg.mxu0
    %762 = vmatpush.bf16.msra.mxu0 %v582
    %763 = vmatpush.bf16.msra.mxu0 %v580
    %764 = vmatpush.bf16.msra.mxu0 %v578
    %765 = vmatpush.bf16.msra.mxu0 %v576
    %766 = vmatpush.bf16.msra.mxu0 %v574
    %767 = vmatpush.bf16.msra.mxu0 %v572
    %768 = vmatpush.bf16.msra.mxu0 %v570
    %769 = vmatpush.bf16.msra.mxu0 %v568
    %770 = vmatmul.bf16.gmra.mxu0 %v133
    %v771 = vpop.f32.mrf.mxu0
    %v772 = vadd.f32 %v759, %v771
    %v773 = vpop.f32.mrf.mxu0
    %774 = vdwg.mxu0
    %775 = vmatpush.bf16.msra.mxu0 %v598
    %776 = vmatpush.bf16.msra.mxu0 %v596
    %777 = vmatpush.bf16.msra.mxu0 %v594
    %778 = vmatpush.bf16.msra.mxu0 %v592
    %779 = vmatpush.bf16.msra.mxu0 %v590
    %780 = vmatpush.bf16.msra.mxu0 %v588
    %781 = vmatpush.bf16.msra.mxu0 %v586
    %782 = vmatpush.bf16.msra.mxu0 %v584
    %783 = vmatmul.bf16.gmra.mxu0 %v134
    %v784 = vpop.f32.mrf.mxu0
    %v785 = vadd.f32 %v772, %v784
    %v786 = vpop.f32.mrf.mxu0
    %787 = vdwg.mxu0
    %788 = vmatpush.bf16.msra.mxu0 %v614
    %789 = vmatpush.bf16.msra.mxu0 %v612
    %790 = vmatpush.bf16.msra.mxu0 %v610
    %791 = vmatpush.bf16.msra.mxu0 %v608
    %792 = vmatpush.bf16.msra.mxu0 %v606
    %793 = vmatpush.bf16.msra.mxu0 %v604
    %794 = vmatpush.bf16.msra.mxu0 %v602
    %795 = vmatpush.bf16.msra.mxu0 %v600
    %796 = vmatmul.bf16.gmra.mxu0 %v135
    %v797 = vpop.f32.mrf.mxu0
    %v798 = vadd.f32 %v785, %v797
    %v799 = vpop.f32.mrf.mxu0
    %800 = vdwg.mxu0
    %801 = vmatpush.bf16.msra.mxu0 %v630
    %802 = vmatpush.bf16.msra.mxu0 %v628
    %803 = vmatpush.bf16.msra.mxu0 %v626
    %804 = vmatpush.bf16.msra.mxu0 %v624
    %805 = vmatpush.bf16.msra.mxu0 %v622
    %806 = vmatpush.bf16.msra.mxu0 %v620
    %807 = vmatpush.bf16.msra.mxu0 %v618
    %808 = vmatpush.bf16.msra.mxu0 %v616
    %809 = vmatmul.bf16.gmra.mxu0 %v136
    %v810 = vpop.f32.mrf.mxu0
    %v811 = vadd.f32 %v798, %v810
    %v812 = vpop.f32.mrf.mxu0
    %813 = vdwg.mxu0
    %814 = vmatpush.bf16.msra.mxu0 0
    %815 = vmatpush.bf16.msra.mxu0 0
    %816 = vmatpush.bf16.msra.mxu0 0
    %817 = vmatpush.bf16.msra.mxu0 0
    %818 = vmatpush.bf16.msra.mxu0 0
    %819 = vmatpush.bf16.msra.mxu0 0
    %820 = vmatpush.bf16.msra.mxu0 0
    %821 = vmatpush.bf16.msra.mxu0 %v632
    %822 = vmatmul.bf16.gmra.mxu0 %v734
    %v823 = vpop.f32.mrf.mxu0
    %v824 = vadd.f32 %v811, %v823
    %v825 = vpop.f32.mrf.mxu0
    %826 = vdwg.mxu0
    %827 = vmatpush.bf16.msra.mxu0 %v551
    %828 = vmatpush.bf16.msra.mxu0 %v549
    %829 = vmatpush.bf16.msra.mxu0 %v547
    %830 = vmatpush.bf16.msra.mxu0 %v545
    %831 = vmatpush.bf16.msra.mxu0 %v543
    %832 = vmatpush.bf16.msra.mxu0 %v541
    %833 = vmatpush.bf16.msra.mxu0 %v539
    %834 = vmatpush.bf16.msra.mxu0 %v537
    %835 = vmatmul.bf16.gmra.mxu0 %v131
    %v836 = vpop.f32.mrf.mxu0
    %v837 = vadd.f32 %v239, %v836
    %v838 = vpop.f32.mrf.mxu0
    %839 = vdwg.mxu0
    %840 = vmatpush.bf16.msra.mxu0 %v567
    %841 = vmatpush.bf16.msra.mxu0 %v565
    %842 = vmatpush.bf16.msra.mxu0 %v563
    %843 = vmatpush.bf16.msra.mxu0 %v561
    %844 = vmatpush.bf16.msra.mxu0 %v559
    %845 = vmatpush.bf16.msra.mxu0 %v557
    %846 = vmatpush.bf16.msra.mxu0 %v555
    %847 = vmatpush.bf16.msra.mxu0 %v553
    %848 = vmatmul.bf16.gmra.mxu0 %v132
    %v849 = vpop.f32.mrf.mxu0
    %v850 = vadd.f32 %v837, %v849
    %v851 = vpop.f32.mrf.mxu0
    %852 = vdwg.mxu0
    %853 = vmatpush.bf16.msra.mxu0 %v583
    %854 = vmatpush.bf16.msra.mxu0 %v581
    %855 = vmatpush.bf16.msra.mxu0 %v579
    %856 = vmatpush.bf16.msra.mxu0 %v577
    %857 = vmatpush.bf16.msra.mxu0 %v575
    %858 = vmatpush.bf16.msra.mxu0 %v573
    %859 = vmatpush.bf16.msra.mxu0 %v571
    %860 = vmatpush.bf16.msra.mxu0 %v569
    %861 = vmatmul.bf16.gmra.mxu0 %v133
    %v862 = vpop.f32.mrf.mxu0
    %v863 = vadd.f32 %v850, %v862
    %v864 = vpop.f32.mrf.mxu0
    %865 = vdwg.mxu0
    %866 = vmatpush.bf16.msra.mxu0 %v599
    %867 = vmatpush.bf16.msra.mxu0 %v597
    %868 = vmatpush.bf16.msra.mxu0 %v595
    %869 = vmatpush.bf16.msra.mxu0 %v593
    %870 = vmatpush.bf16.msra.mxu0 %v591
    %871 = vmatpush.bf16.msra.mxu0 %v589
    %872 = vmatpush.bf16.msra.mxu0 %v587
    %873 = vmatpush.bf16.msra.mxu0 %v585
    %874 = vmatmul.bf16.gmra.mxu0 %v134
    %v875 = vpop.f32.mrf.mxu0
    %v876 = vadd.f32 %v863, %v875
    %v877 = vpop.f32.mrf.mxu0
    %878 = vdwg.mxu0
    %879 = vmatpush.bf16.msra.mxu0 %v615
    %880 = vmatpush.bf16.msra.mxu0 %v613
    %881 = vmatpush.bf16.msra.mxu0 %v611
    %882 = vmatpush.bf16.msra.mxu0 %v609
    %883 = vmatpush.bf16.msra.mxu0 %v607
    %884 = vmatpush.bf16.msra.mxu0 %v605
    %885 = vmatpush.bf16.msra.mxu0 %v603
    %886 = vmatpush.bf16.msra.mxu0 %v601
    %887 = vmatmul.bf16.gmra.mxu0 %v135
    %v888 = vpop.f32.mrf.mxu0
    %v889 = vadd.f32 %v876, %v888
    %v890 = vpop.f32.mrf.mxu0
    %891 = vdwg.mxu0
    %892 = vmatpush.bf16.msra.mxu0 %v631
    %893 = vmatpush.bf16.msra.mxu0 %v629
    %894 = vmatpush.bf16.msra.mxu0 %v627
    %895 = vmatpush.bf16.msra.mxu0 %v625
    %896 = vmatpush.bf16.msra.mxu0 %v623
    %897 = vmatpush.bf16.msra.mxu0 %v621
    %898 = vmatpush.bf16.msra.mxu0 %v619
    %899 = vmatpush.bf16.msra.mxu0 %v617
    %900 = vmatmul.bf16.gmra.mxu0 %v136
    %v901 = vpop.f32.mrf.mxu0
    %v902 = vadd.f32 %v889, %v901
    %v903 = vpop.f32.mrf.mxu0
    %904 = vdwg.mxu0
    %905 = vmatpush.bf16.msra.mxu0 0
    %906 = vmatpush.bf16.msra.mxu0 0
    %907 = vmatpush.bf16.msra.mxu0 0
    %908 = vmatpush.bf16.msra.mxu0 0
    %909 = vmatpush.bf16.msra.mxu0 0
    %910 = vmatpush.bf16.msra.mxu0 0
    %911 = vmatpush.bf16.msra.mxu0 0
    %912 = vmatpush.bf16.msra.mxu0 %v633
    %913 = vmatmul.bf16.gmra.mxu0 %v734
    %v914 = vpop.f32.mrf.mxu0
    %v915 = vadd.f32 %v902, %v914
    %v916 = vpop.f32.mrf.mxu0
    %917 = vdwg.mxu0
    %v918 = vmax.f32 %v824, 0.0
    %v919 = vmax.f32 %v915, 0.0
    %v920 = vpack.c.bf16 %v918, %v918
    %v921 = vpack.c.bf16 %v919, %v919
    %v922 = vld [vmem:[#allocation8] sm:$0xf]
    %v923 = vld [vmem:[#allocation8 + $0x4] sm:$0xf]
    %v924 = vld [vmem:[#allocation8 + $0x8] sm:$0xf]
    %v925 = vld [vmem:[#allocation8 + $0xc] sm:$0xf]
    %v926 = vld [vmem:[#allocation8 + $0x10] sm:$0xf]
    %v927 = vld [vmem:[#allocation8 + $0x14] sm:$0xf]
    %v928 = vld [vmem:[#allocation8 + $0x18] sm:$0xf]
    %v929 = vld [vmem:[#allocation8 + $0x1c] sm:$0xf]
    %v930 = vld [vmem:[#allocation8 + $0x20] sm:$0xf]
    %v931 = vld [vmem:[#allocation8 + $0x24] sm:$0xf]
    %v932 = vld [vmem:[#allocation8 + $0x28] sm:$0xf]
    %v933 = vld [vmem:[#allocation8 + $0x2c] sm:$0xf]
    %v934 = vld [vmem:[#allocation8 + $0x30] sm:$0xf]
    %v935 = vld [vmem:[#allocation8 + $0x34] sm:$0xf]
    %v936 = vld [vmem:[#allocation8 + $0x38] sm:$0xf]
    %v937 = vld [vmem:[#allocation8 + $0x3c] sm:$0xf]
    %v938 = vld [vmem:[#allocation8 + $0x40] sm:$0xf]
    %v939 = vld [vmem:[#allocation8 + $0x44] sm:$0xf]
    %v940 = vld [vmem:[#allocation8 + $0x48] sm:$0xf]
    %v941 = vld [vmem:[#allocation8 + $0x4c] sm:$0xf]
    %v942 = vld [vmem:[#allocation8 + $0x50] sm:$0xf]
    %v943 = vld [vmem:[#allocation8 + $0x54] sm:$0xf]
    %v944 = vld [vmem:[#allocation8 + $0x58] sm:$0xf]
    %v945 = vld [vmem:[#allocation8 + $0x5c] sm:$0xf]
    %v946 = vld [vmem:[#allocation8 + $0x60] sm:$0xf]
    %v947 = vld [vmem:[#allocation8 + $0x64] sm:$0xf]
    %v948 = vld [vmem:[#allocation8 + $0x68] sm:$0xf]
    %v949 = vld [vmem:[#allocation8 + $0x6c] sm:$0xf]
    %v950 = vld [vmem:[#allocation8 + $0x70] sm:$0xf]
    %v951 = vld [vmem:[#allocation8 + $0x74] sm:$0xf]
    %v952 = vld [vmem:[#allocation8 + $0x78] sm:$0xf]
    %v953 = vld [vmem:[#allocation8 + $0x7c] sm:$0xf]
    %v954 = vld [vmem:[%s4] sm:$0x1]
    %v956 = vperm.slane %v954, 0
    %v990 = vunpack.c.l.b16 %v922
    %v991 = vunpack.c.l.b16 %v923
    %v992 = vunpack.c.l.b16 %v924
    %v993 = vunpack.c.l.b16 %v925
    %v994 = vunpack.c.l.b16 %v926
    %v995 = vunpack.c.l.b16 %v927
    %v996 = vunpack.c.l.b16 %v928
    %v997 = vunpack.c.l.b16 %v929
    %v998 = vunpack.c.l.b16 %v930
    %v999 = vunpack.c.l.b16 %v931
    %v1000 = vunpack.c.l.b16 %v932
    %v1001 = vunpack.c.l.b16 %v933
    %v1002 = vunpack.c.l.b16 %v934
    %v1003 = vunpack.c.l.b16 %v935
    %v1004 = vunpack.c.l.b16 %v936
    %v1005 = vunpack.c.l.b16 %v937
    %v1006 = vunpack.c.l.b16 %v938
    %v1007 = vunpack.c.l.b16 %v939
    %v1008 = vunpack.c.l.b16 %v940
    %v1009 = vunpack.c.l.b16 %v941
    %v1010 = vunpack.c.l.b16 %v942
    %v1011 = vunpack.c.l.b16 %v943
    %v1012 = vunpack.c.l.b16 %v944
    %v1013 = vunpack.c.l.b16 %v945
    %v1014 = vunpack.c.l.b16 %v946
    %v1015 = vunpack.c.l.b16 %v947
    %v1016 = vunpack.c.l.b16 %v948
    %v1017 = vunpack.c.l.b16 %v949
    %v1018 = vunpack.c.l.b16 %v950
    %v1019 = vunpack.c.l.b16 %v951
    %v1020 = vunpack.c.l.b16 %v952
    %v1021 = vunpack.c.l.b16 %v953
    %v1022 = vpack.c.b16 %v991, %v990
    %v1023 = vpack.c.b16 %v993, %v992
    %v1024 = vpack.c.b16 %v995, %v994
    %v1025 = vpack.c.b16 %v997, %v996
    %v1026 = vpack.c.b16 %v999, %v998
    %v1027 = vpack.c.b16 %v1001, %v1000
    %v1028 = vpack.c.b16 %v1003, %v1002
    %v1029 = vpack.c.b16 %v1005, %v1004
    %v1030 = vpack.c.b16 %v1007, %v1006
    %v1031 = vpack.c.b16 %v1009, %v1008
    %v1032 = vpack.c.b16 %v1011, %v1010
    %v1033 = vpack.c.b16 %v1013, %v1012
    %v1034 = vpack.c.b16 %v1015, %v1014
    %v1035 = vpack.c.b16 %v1017, %v1016
    %v1036 = vpack.c.b16 %v1019, %v1018
    %v1037 = vpack.c.b16 %v1021, %v1020
    %1054 = vmatpush.bf16.msra.mxu0 %v1029
    %1055 = vmatpush.bf16.msra.mxu0 %v1028
    %1056 = vmatpush.bf16.msra.mxu0 %v1027
    %1057 = vmatpush.bf16.msra.mxu0 %v1026
    %1058 = vmatpush.bf16.msra.mxu0 %v1025
    %1059 = vmatpush.bf16.msra.mxu0 %v1024
    %1060 = vmatpush.bf16.msra.mxu0 %v1023
    %1061 = vmatpush.bf16.msra.mxu0 %v1022
    %1062 = vmatmul.bf16.gmra.mxu0 %v920
    %v1063 = vpop.f32.mrf.mxu0
    %v1064 = vadd.f32 %v956, %v1063
    %v1065 = vpop.f32.mrf.mxu0
    %1066 = vdwg.mxu0
    %1067 = vmatpush.bf16.msra.mxu0 %v1037
    %1068 = vmatpush.bf16.msra.mxu0 %v1036
    %1069 = vmatpush.bf16.msra.mxu0 %v1035
    %1070 = vmatpush.bf16.msra.mxu0 %v1034
    %1071 = vmatpush.bf16.msra.mxu0 %v1033
    %1072 = vmatpush.bf16.msra.mxu0 %v1032
    %1073 = vmatpush.bf16.msra.mxu0 %v1031
    %1074 = vmatpush.bf16.msra.mxu0 %v1030
    %1075 = vmatmul.bf16.gmra.mxu0 %v921
    %v1076 = vpop.f32.mrf.mxu0
    %v1077 = vadd.f32 %v1064, %v1076
    %v1078 = vpop.f32.mrf.mxu0
    %1079 = vdwg.mxu0
    %v1080 = vmax.f32 %v1077, 0.0
    %v1081 = vpack.c.bf16 %v1080, %v1080
    %v1082 = vld [vmem:[#allocation10] sm:$0xf]
    %v1083 = vld [vmem:[#allocation10 + $0x4] sm:$0xf]
    %v1084 = vld [vmem:[#allocation10 + $0x8] sm:$0xf]
    %v1085 = vld [vmem:[#allocation10 + $0xc] sm:$0xf]
    %v1086 = vld [vmem:[#allocation10 + $0x10] sm:$0xf]
    %v1087 = vld [vmem:[#allocation10 + $0x14] sm:$0xf]
    %v1088 = vld [vmem:[#allocation10 + $0x18] sm:$0xf]
    %v1089 = vld [vmem:[#allocation10 + $0x1c] sm:$0xf]
    %v1090 = vld [vmem:[#allocation10 + $0x20] sm:$0xf]
    %v1091 = vld [vmem:[#allocation10 + $0x24] sm:$0xf]
    %v1092 = vld [vmem:[#allocation10 + $0x28] sm:$0xf]
    %v1093 = vld [vmem:[#allocation10 + $0x2c] sm:$0xf]
    %v1094 = vld [vmem:[#allocation10 + $0x30] sm:$0xf]
    %v1095 = vld [vmem:[#allocation10 + $0x34] sm:$0xf]
    %v1096 = vld [vmem:[#allocation10 + $0x38] sm:$0xf]
    %v1097 = vld [vmem:[#allocation10 + $0x3c] sm:$0xf]
    %v1098 = vld [vmem:[%s6] sm:$0x1]
    %v1100 = vperm.slane %v1098, 0
    %v1118 = vunpack.c.l.b16 %v1082
    %v1119 = vunpack.c.l.b16 %v1083
    %v1120 = vunpack.c.l.b16 %v1084
    %v1121 = vunpack.c.l.b16 %v1085
    %v1122 = vunpack.c.l.b16 %v1086
    %v1123 = vunpack.c.l.b16 %v1087
    %v1124 = vunpack.c.l.b16 %v1088
    %v1125 = vunpack.c.l.b16 %v1089
    %v1126 = vunpack.c.l.b16 %v1090
    %v1127 = vunpack.c.l.b16 %v1091
    %v1128 = vunpack.c.l.b16 %v1092
    %v1129 = vunpack.c.l.b16 %v1093
    %v1130 = vunpack.c.l.b16 %v1094
    %v1131 = vunpack.c.l.b16 %v1095
    %v1132 = vunpack.c.l.b16 %v1096
    %v1133 = vunpack.c.l.b16 %v1097
    %v1134 = vpack.c.b16 %v1119, %v1118
    %v1135 = vpack.c.b16 %v1121, %v1120
    %v1136 = vpack.c.b16 %v1123, %v1122
    %v1137 = vpack.c.b16 %v1125, %v1124
    %v1138 = vpack.c.b16 %v1127, %v1126
    %v1139 = vpack.c.b16 %v1129, %v1128
    %v1140 = vpack.c.b16 %v1131, %v1130
    %v1141 = vpack.c.b16 %v1133, %v1132
    %1150 = vmatpush.bf16.msra.mxu0 %v1141
    %1151 = vmatpush.bf16.msra.mxu0 %v1140
    %1152 = vmatpush.bf16.msra.mxu0 %v1139
    %1153 = vmatpush.bf16.msra.mxu0 %v1138
    %1154 = vmatpush.bf16.msra.mxu0 %v1137
    %1155 = vmatpush.bf16.msra.mxu0 %v1136
    %1156 = vmatpush.bf16.msra.mxu0 %v1135
    %1157 = vmatpush.bf16.msra.mxu0 %v1134
    %1158 = vmatmul.bf16.gmra.mxu0 %v1081
    %v1159 = vpop.f32.mrf.mxu0
    %v1160 = vadd.f32 %v1100, %v1159
    %v1161 = vpop.f32.mrf.mxu0
    %1162 = vdwg.mxu0
    %v1163 = vmax.f32 %v1160, 0.0
    %v1164 = vpack.c.bf16 %v1163, %v1163
    %v1165 = vld [vmem:[#allocation11] sm:$0xf]
    %v1166 = vld [vmem:[#allocation11 + $0x4] sm:$0xf]
    %v1167 = vld [vmem:[#allocation11 + $0x8] sm:$0xf]
    %v1168 = vld [vmem:[#allocation11 + $0xc] sm:$0xf]
    %v1169 = vld [vmem:[#allocation11 + $0x10] sm:$0xf]
    %v1170 = vld [vmem:[#allocation11 + $0x14] sm:$0xf]
    %v1171 = vld [vmem:[#allocation11 + $0x18] sm:$0xf]
    %v1172 = vld [vmem:[#allocation11 + $0x1c] sm:$0xf]
    %v1173 = vld [vmem:[#allocation11 + $0x20] sm:$0xf]
    %v1174 = vld [vmem:[#allocation11 + $0x24] sm:$0xf]
    %v1175 = vld [vmem:[#allocation11 + $0x28] sm:$0xf]
    %v1176 = vld [vmem:[#allocation11 + $0x2c] sm:$0xf]
    %v1177 = vld [vmem:[#allocation11 + $0x30] sm:$0xf]
    %v1178 = vld [vmem:[#allocation11 + $0x34] sm:$0xf]
    %v1179 = vld [vmem:[#allocation11 + $0x38] sm:$0xf]
    %v1180 = vld [vmem:[#allocation11 + $0x3c] sm:$0xf]
    %v1181 = vld [vmem:[%s8] sm:$0x1]
    %v1183 = vperm.slane %v1181, 0
    %v1201 = vunpack.c.l.b16 %v1165
    %v1202 = vunpack.c.l.b16 %v1166
    %v1203 = vunpack.c.l.b16 %v1167
    %v1204 = vunpack.c.l.b16 %v1168
    %v1205 = vunpack.c.l.b16 %v1169
    %v1206 = vunpack.c.l.b16 %v1170
    %v1207 = vunpack.c.l.b16 %v1171
    %v1208 = vunpack.c.l.b16 %v1172
    %v1209 = vunpack.c.l.b16 %v1173
    %v1210 = vunpack.c.l.b16 %v1174
    %v1211 = vunpack.c.l.b16 %v1175
    %v1212 = vunpack.c.l.b16 %v1176
    %v1213 = vunpack.c.l.b16 %v1177
    %v1214 = vunpack.c.l.b16 %v1178
    %v1215 = vunpack.c.l.b16 %v1179
    %v1216 = vunpack.c.l.b16 %v1180
    %v1217 = vpack.c.b16 %v1202, %v1201
    %v1218 = vpack.c.b16 %v1204, %v1203
    %v1219 = vpack.c.b16 %v1206, %v1205
    %v1220 = vpack.c.b16 %v1208, %v1207
    %v1221 = vpack.c.b16 %v1210, %v1209
    %v1222 = vpack.c.b16 %v1212, %v1211
    %v1223 = vpack.c.b16 %v1214, %v1213
    %v1224 = vpack.c.b16 %v1216, %v1215
    %1233 = vmatpush.bf16.msra.mxu0 %v1224
    %1234 = vmatpush.bf16.msra.mxu0 %v1223
    %1235 = vmatpush.bf16.msra.mxu0 %v1222
    %1236 = vmatpush.bf16.msra.mxu0 %v1221
    %1237 = vmatpush.bf16.msra.mxu0 %v1220
    %1238 = vmatpush.bf16.msra.mxu0 %v1219
    %1239 = vmatpush.bf16.msra.mxu0 %v1218
    %1240 = vmatpush.bf16.msra.mxu0 %v1217
    %1241 = vmatmul.bf16.gmra.mxu0 %v1164
    %v1242 = vpop.f32.mrf.mxu0
    %v1243 = vadd.f32 %v1183, %v1242
    %v1244 = vpop.f32.mrf.mxu0
    %1245 = vdwg.mxu0
    %1246 = vmax.xlane.f32.xlu0 %v1243
    %v1247 = vpop.xlane.xlu0 %1246
    %v1248 = vsub.f32 %v1243, %v1247
    %v1249 = vmul.f32 %v1248, 1.442695
    %v1250 = vpow.pop %v1249
    %1251 = vadd.xlane.f32.xlu0 %v1250
    %v1252 = vpop.xlane.xlu0 %1251
    %v1253 = vrcp.pop %v1252
    %v1254 = vmul.f32 %v1252, %v1253
    %v1255 = vsub.f32 1.0, %v1254
    %v1256 = vmul.f32 %v1253, %v1255
    %v1257 = vadd.f32 %v1253, %v1256
    %vm1258 = vweird.f32 %v1252
    %vm1259 = vweird.f32 %v1253
    %vm1260 = vmor %vm1258, %vm1259
    %v1261 = vsel %vm1260, %v1253, %v1257
    %v1262 = vand.u32 2147483647, %v1252
    %vm1263 = vcmp.eq.f32.partialorder %v1262, 8.507059e+37
    %v1264 = vand.u32 %v1252, 2147483648
    %v1265 = vor.u32 1.1754944e-38, %v1264
    %v1266 = vsel %vm1263, %v1265, %v1261
    %v1267 = vmul.f32 %v1250, %v1266
    %1268 = vst [vmem:[#allocation13] sm:$0xff] %v1267
    // Predicated region
    $region62: #{tpu_custom_call.1} parent=1 // pred_check
      _
    $region63: #{tpu_custom_call.1} parent=1 // pred_check_branch
      %1270 = sbr.rel (0) target = $region65
    $region64: #{tpu_custom_call.1} parent=1 // pred_region
      %1272 = vsyncadd [#allocation4], 0
      %s1274 = sshll.u32 [#allocation13], 4
      %s1275 = int_to_ptr.vmem [resolvable:$true] %s1274
      %s1276 = sshll.u32 %s9, 4
      %s1277 = int_to_ptr.hbm [resolvable:$true] %s1276
      %1279 = dma.vmem_to_hbm [thread:$0]  %s1275, 128, %s1277, [#allocation4]
    $region65: #{tpu_custom_call.1} parent=1 // pred_fallthru
      _
    // Predicated region
    $region66: #{tpu_custom_call.1} parent=1 // pred_check
      _
    $region67: #{tpu_custom_call.1} parent=1 // pred_check_branch
      %1281 = sbr.rel (0) target = $region69
    $region68: #{tpu_custom_call.1} parent=1 // pred_region
      %1283 = dma.done [#allocation4], 128
    $region69: #{tpu_custom_call.1} parent=1 // pred_fallthru
      _
    %1284 = vsyncpa [#allocation3], 1
    %1285 = vsyncpa [#allocation6], 1
    %1286 = vsyncpa [#allocation9], 1
    %1287 = vsyncpa [#allocation12], 1
    %1288 = vsyncpa [#allocation4], 1

</llo_original>
